<compile_context>
chip_gen: v7x
topology: tpu7x:2x2x1
jax: 0.10.0
libtpu: 0.0.40
codegen_flags: <defaults>
</compile_context>

<pallas_src>
import math

import jax
import jax.numpy as jnp
from jax.experimental import pallas as pl
from jax.experimental.pallas import tpu as pltpu


N_LAYERS = 6
D_IN = 128
OUT_DIM = 2
TM_MAX = 512  # batch tile (multiple of 16; keeps grid >= 2 on v7x once B > 512)


def _round_up(n, m):
    return -(-n // m) * m


# ----------------------------------------------------------------------------
# Fused kernel: all 6 matmuls + ReLUs + both residual adds in one pass.
# ----------------------------------------------------------------------------
def _input_not_used_kernel(x1_ref, x2_ref, x3_ref, *rest):
    w_refs = rest[:N_LAYERS]                       # (in_i, out_i) bf16, natural sizes
    b_refs = rest[N_LAYERS:2 * N_LAYERS]           # (1, out_i)   f32
    x_out_ref = rest[2 * N_LAYERS]                 # (TM, 2) f32
    y_out_ref = rest[2 * N_LAYERS + 1]             # (TM, 2) f32

    h = x1_ref[...]                                # (TM, 128) bf16
    for i in range(N_LAYERS):                      # statically unrolled
        # Narrow dot shapes per layer (K = 128,64,32,16,8,4; N = 64,...,2):
        # no padded 128x128 MAC waste; f32 accumulation on the MXU.
        h = jnp.dot(h, w_refs[i][...],
                    preferred_element_type=jnp.float32) + b_refs[i][...]
        if i < N_LAYERS - 1:
            h = jnp.maximum(h, 0.0).astype(jnp.bfloat16)   # ReLU (inplace is moot)

    x2 = x2_ref[...]                               # (TM, 2) f32
    x_out_ref[...] = (h + x2).astype(x_out_ref.dtype)
    # y = Identity(ReLU(x2)) + x3
    y_out_ref[...] = (jnp.maximum(x2, 0.0) + x3_ref[...]).astype(y_out_ref.dtype)


# ----------------------------------------------------------------------------
# Parameter packing (done once, outside the jitted forward)
# ----------------------------------------------------------------------------
def prepare_params(params):
    """params: list of 6 (w, b) with PyTorch layout w: (out, in), b: (out,).
    Returns a flat tuple (w1..w6, b1..b6): weights pre-transposed to (in, out)
    and cast to bf16 (natural sizes, no padding); biases (1, out) f32."""
    ws = tuple(jnp.asarray(w, jnp.float32).T.astype(jnp.bfloat16) for w, _ in params)
    bs = tuple(jnp.asarray(b, jnp.float32).reshape(1, -1) for _, b in params)
    return ws + bs


# ----------------------------------------------------------------------------
# Forward wrapper
# ----------------------------------------------------------------------------
def input_not_used_forward(x1, x2, x3, x4, packed_params):
    del x4  # input not used, matching the PyTorch module
    B, d_in = x1.shape
    assert d_in == D_IN
    assert x2.shape == (B, OUT_DIM) and x3.shape == (B, OUT_DIM)

    # Batch tiling: TM is a multiple of 16 (bf16 sublane tile) and Bp is a
    # multiple of TM, so grid = Bp // TM covers every row (no truncation).
    bp16 = _round_up(max(B, 1), 16)
    TM = bp16 if bp16 <= TM_MAX else TM_MAX
    Bp = _round_up(B, TM)
    grid = (Bp // TM,)

    def pad_rows(a, dtype):
        a = a.astype(dtype)
        return jnp.pad(a, ((0, Bp - B), (0, 0))) if Bp != B else a

    x1p = pad_rows(x1, jnp.bfloat16)   # (Bp, 128) bf16
    x2p = pad_rows(x2, jnp.float32)    # (Bp, 2)   natural width — no lane padding
    x3p = pad_rows(x3, jnp.float32)    # (Bp, 2)

    ws = packed_params[:N_LAYERS]
    bs = packed_params[N_LAYERS:]

    def row_spec(width):
        return pl.BlockSpec((TM, width), lambda i: (i, 0))

    def const_spec(shape):
        # Constant block index: fetched once, not re-DMA'd per grid step.
        return pl.BlockSpec(shape, lambda i: (0, 0))

    in_specs = [row_spec(D_IN), row_spec(OUT_DIM), row_spec(OUT_DIM)]
    in_specs += [const_spec(w.shape) for w in ws]
    in_specs += [const_spec(b.shape) for b in bs]

    x_out, y_out = pl.pallas_call(
        _input_not_used_kernel,
        out_shape=(jax.ShapeDtypeStruct((Bp, OUT_DIM), jnp.float32),
                   jax.ShapeDtypeStruct((Bp, OUT_DIM), jnp.float32)),
        grid=grid,
        in_specs=in_specs,
        out_specs=(row_spec(OUT_DIM), row_spec(OUT_DIM)),
        compiler_params=pltpu.CompilerParams(
            dimension_semantics=("parallel",)),
    )(x1p, x2p, x3p, *ws, *bs)

    return x_out[:B], y_out[:B]


# ----------------------------------------------------------------------------
# Pure-JAX reference (f32) for the correctness check
# ----------------------------------------------------------------------------
def _ref_forward(x1, x2, x3, params):
    h = x1
    for idx, (w, b) in enumerate(params):
        h = h @ w.T + b
        if idx < len(params) - 1:
            h = jnp.maximum(h, 0.0)
    return h + x2, jnp.maximum(x2, 0.0) + x3


if __name__ == "__main__":
    key = jax.random.PRNGKey(0)
    ks = jax.random.split(key, 16)

    # nn.Linear params: (out, in) per PyTorch, uniform(-1/sqrt(in), 1/sqrt(in)).
    dims = [(64, 128), (32, 64), (16, 32), (8, 16), (4, 8), (2, 4)]
    params = []
    for i, (o, n) in enumerate(dims):
        bound = 1.0 / math.sqrt(n)
        w = jax.random.uniform(ks[2 * i], (o, n), jnp.float32, -bound, bound)
        b = jax.random.uniform(ks[2 * i + 1], (o,), jnp.float32, -bound, bound)
        params.append((w, b))
    packed = prepare_params(params)

    fwd = jax.jit(input_not_used_forward)

    # Primary (small) test: batch = 2.
    B = 2
    x1 = jax.random.normal(ks[12], (B, 128), jnp.float32)
    x2 = jax.random.normal(ks[13], (B, 2), jnp.float32)
    x3 = jax.random.normal(ks[14], (B, 2), jnp.float32)
    x4 = jax.random.normal(ks[15], (B, 2), jnp.float32)  # intentionally unused

    x_out, y_out = fwd(x1, x2, x3, x4, packed)
    jax.block_until_ready((x_out, y_out))

    x_ref, y_ref = _ref_forward(x1, x2, x3, params)
    assert x_out.shape == (B, 2) and y_out.shape == (B, 2)
    assert bool(jnp.all(jnp.isfinite(x_out))) and bool(jnp.all(jnp.isfinite(y_out)))
    # bf16 MXU operands (matching TPU default-precision f32 matmul behavior):
    # allow ~1e-2 slack on the matmul branch, tight on the pure-f32 y branch.
    assert bool(jnp.allclose(x_out, x_ref, atol=2e-2, rtol=2e-2))
    assert bool(jnp.allclose(y_out, y_ref, atol=1e-6, rtol=1e-6))

    # Secondary shape check: B not a multiple of the tile — exercises the
    # Bp = round_up(B, TM) fix for the previous grid-truncation bug.
    B2 = 130
    x1b = jax.random.normal(ks[12], (B2, 128), jnp.float32)
    x2b = jax.random.normal(ks[13], (B2, 2), jnp.float32)
    x3b = jax.random.normal(ks[14], (B2, 2), jnp.float32)
    x4b = jax.random.normal(ks[15], (B2, 2), jnp.float32)
    xb, yb = fwd(x1b, x2b, x3b, x4b, packed)
    jax.block_until_ready((xb, yb))
    xbr, ybr = _ref_forward(x1b, x2b, x3b, params)
    assert xb.shape == (B2, 2) and yb.shape == (B2, 2)
    assert bool(jnp.allclose(xb, xbr, atol=2e-2, rtol=2e-2))
    assert bool(jnp.allclose(yb, ybr, atol=1e-6, rtol=1e-6))

    print("KERNEL_OK")
</pallas_src>

<mosaic_0001>
module attributes {stable_mosaic.version = 11 : i64} {
  func.func @_input_not_used_kernel(%arg0: i32, %arg1: memref<16x128xbf16, #tpu.memory_space<vmem>>, %arg2: memref<16x2xf32, #tpu.memory_space<vmem>>, %arg3: memref<16x2xf32, #tpu.memory_space<vmem>>, %arg4: memref<128x64xbf16, #tpu.memory_space<vmem>>, %arg5: memref<64x32xbf16, #tpu.memory_space<vmem>>, %arg6: memref<32x16xbf16, #tpu.memory_space<vmem>>, %arg7: memref<16x8xbf16, #tpu.memory_space<vmem>>, %arg8: memref<8x4xbf16, #tpu.memory_space<vmem>>, %arg9: memref<4x2xbf16, #tpu.memory_space<vmem>>, %arg10: memref<1x64xf32, #tpu.memory_space<vmem>>, %arg11: memref<1x32xf32, #tpu.memory_space<vmem>>, %arg12: memref<1x16xf32, #tpu.memory_space<vmem>>, %arg13: memref<1x8xf32, #tpu.memory_space<vmem>>, %arg14: memref<1x4xf32, #tpu.memory_space<vmem>>, %arg15: memref<1x2xf32, #tpu.memory_space<vmem>>, %arg16: memref<16x2xf32, #tpu.memory_space<vmem>>, %arg17: memref<16x2xf32, #tpu.memory_space<vmem>>) attributes {dimension_semantics = [#tpu.dimension_semantics<parallel>], iteration_bounds = array<i64: 1>, scalar_prefetch = 0 : i64, scratch_operands = 0 : i64, tpu.core_type = #tpu.core_type<tc>, window_params = [{transform_indices = @transform_0, window_bounds = array<i64: 16, 128>}, {transform_indices = @transform_1, window_bounds = array<i64: 16, 2>}, {transform_indices = @transform_2, window_bounds = array<i64: 16, 2>}, {pipeline_mode = #tpu.pipeline_mode<synchronous>, transform_indices = @transform_3, window_bounds = array<i64: 128, 64>}, {pipeline_mode = #tpu.pipeline_mode<synchronous>, transform_indices = @transform_4, window_bounds = array<i64: 64, 32>}, {pipeline_mode = #tpu.pipeline_mode<synchronous>, transform_indices = @transform_5, window_bounds = array<i64: 32, 16>}, {pipeline_mode = #tpu.pipeline_mode<synchronous>, transform_indices = @transform_6, window_bounds = array<i64: 16, 8>}, {pipeline_mode = #tpu.pipeline_mode<synchronous>, transform_indices = @transform_7, window_bounds = array<i64: 8, 4>}, {pipeline_mode = #tpu.pipeline_mode<synchronous>, transform_indices = @transform_8, window_bounds = array<i64: 4, 2>}, {pipeline_mode = #tpu.pipeline_mode<synchronous>, transform_indices = @transform_9, window_bounds = array<i64: 1, 64>}, {pipeline_mode = #tpu.pipeline_mode<synchronous>, transform_indices = @transform_10, window_bounds = array<i64: 1, 32>}, {pipeline_mode = #tpu.pipeline_mode<synchronous>, transform_indices = @transform_11, window_bounds = array<i64: 1, 16>}, {pipeline_mode = #tpu.pipeline_mode<synchronous>, transform_indices = @transform_12, window_bounds = array<i64: 1, 8>}, {pipeline_mode = #tpu.pipeline_mode<synchronous>, transform_indices = @transform_13, window_bounds = array<i64: 1, 4>}, {pipeline_mode = #tpu.pipeline_mode<synchronous>, transform_indices = @transform_14, window_bounds = array<i64: 1, 2>}, {transform_indices = @transform_15, window_bounds = array<i64: 16, 2>}, {transform_indices = @transform_16, window_bounds = array<i64: 16, 2>}]} {
    %c0 = arith.constant 0 : index
    %c0_0 = arith.constant 0 : index
    %0 = vector.load %arg1[%c0, %c0_0] : memref<16x128xbf16, #tpu.memory_space<vmem>>, vector<16x128xbf16>
    %c0_1 = arith.constant 0 : index
    %c0_2 = arith.constant 0 : index
    %1 = vector.load %arg4[%c0_1, %c0_2] : memref<128x64xbf16, #tpu.memory_space<vmem>>, vector<128x64xbf16>
    %cst = arith.constant dense<0.000000e+00> : vector<16x64xf32>
    %2 = tpu.matmul %0, %1, %cst {dimension_numbers = #tpu.dot_dimension_numbers<[1], [0], [0], [1], [0, 0, 1, 1], [], []>} : vector<16x128xbf16>, vector<128x64xbf16>, vector<16x64xf32> -> vector<16x64xf32>
    %c0_3 = arith.constant 0 : index
    %c0_4 = arith.constant 0 : index
    %3 = vector.load %arg10[%c0_3, %c0_4] : memref<1x64xf32, #tpu.memory_space<vmem>>, vector<1x64xf32>
    %4 = vector.broadcast %3 : vector<1x64xf32> to vector<16x64xf32>
    %5 = arith.addf %2, %4 : vector<16x64xf32>
    %cst_5 = arith.constant 0.000000e+00 : f32
    %6 = vector.broadcast %cst_5 : f32 to vector<16x64xf32>
    %7 = arith.maximumf %5, %6 : vector<16x64xf32>
    %8 = arith.truncf %7 : vector<16x64xf32> to vector<16x64xbf16>
    %c0_6 = arith.constant 0 : index
    %c0_7 = arith.constant 0 : index
    %9 = vector.load %arg5[%c0_6, %c0_7] : memref<64x32xbf16, #tpu.memory_space<vmem>>, vector<64x32xbf16>
    %cst_8 = arith.constant dense<0.000000e+00> : vector<16x32xf32>
    %10 = tpu.matmul %8, %9, %cst_8 {dimension_numbers = #tpu.dot_dimension_numbers<[1], [0], [0], [1], [0, 0, 1, 1], [], []>} : vector<16x64xbf16>, vector<64x32xbf16>, vector<16x32xf32> -> vector<16x32xf32>
    %c0_9 = arith.constant 0 : index
    %c0_10 = arith.constant 0 : index
    %11 = vector.load %arg11[%c0_9, %c0_10] : memref<1x32xf32, #tpu.memory_space<vmem>>, vector<1x32xf32>
    %12 = vector.broadcast %11 : vector<1x32xf32> to vector<16x32xf32>
    %13 = arith.addf %10, %12 : vector<16x32xf32>
    %cst_11 = arith.constant 0.000000e+00 : f32
    %14 = vector.broadcast %cst_11 : f32 to vector<16x32xf32>
    %15 = arith.maximumf %13, %14 : vector<16x32xf32>
    %16 = arith.truncf %15 : vector<16x32xf32> to vector<16x32xbf16>
    %c0_12 = arith.constant 0 : index
    %c0_13 = arith.constant 0 : index
    %17 = vector.load %arg6[%c0_12, %c0_13] : memref<32x16xbf16, #tpu.memory_space<vmem>>, vector<32x16xbf16>
    %cst_14 = arith.constant dense<0.000000e+00> : vector<16x16xf32>
    %18 = tpu.matmul %16, %17, %cst_14 {dimension_numbers = #tpu.dot_dimension_numbers<[1], [0], [0], [1], [0, 0, 1, 1], [], []>} : vector<16x32xbf16>, vector<32x16xbf16>, vector<16x16xf32> -> vector<16x16xf32>
    %c0_15 = arith.constant 0 : index
    %c0_16 = arith.constant 0 : index
    %19 = vector.load %arg12[%c0_15, %c0_16] : memref<1x16xf32, #tpu.memory_space<vmem>>, vector<1x16xf32>
    %20 = vector.broadcast %19 : vector<1x16xf32> to vector<16x16xf32>
    %21 = arith.addf %18, %20 : vector<16x16xf32>
    %cst_17 = arith.constant 0.000000e+00 : f32
    %22 = vector.broadcast %cst_17 : f32 to vector<16x16xf32>
    %23 = arith.maximumf %21, %22 : vector<16x16xf32>
    %24 = arith.truncf %23 : vector<16x16xf32> to vector<16x16xbf16>
    %c0_18 = arith.constant 0 : index
    %c0_19 = arith.constant 0 : index
    %25 = vector.load %arg7[%c0_18, %c0_19] : memref<16x8xbf16, #tpu.memory_space<vmem>>, vector<16x8xbf16>
    %cst_20 = arith.constant dense<0.000000e+00> : vector<16x8xf32>
    %26 = tpu.matmul %24, %25, %cst_20 {dimension_numbers = #tpu.dot_dimension_numbers<[1], [0], [0], [1], [0, 0, 1, 1], [], []>} : vector<16x16xbf16>, vector<16x8xbf16>, vector<16x8xf32> -> vector<16x8xf32>
    %c0_21 = arith.constant 0 : index
    %c0_22 = arith.constant 0 : index
    %27 = vector.load %arg13[%c0_21, %c0_22] : memref<1x8xf32, #tpu.memory_space<vmem>>, vector<1x8xf32>
    %28 = vector.broadcast %27 : vector<1x8xf32> to vector<16x8xf32>
    %29 = arith.addf %26, %28 : vector<16x8xf32>
    %cst_23 = arith.constant 0.000000e+00 : f32
    %30 = vector.broadcast %cst_23 : f32 to vector<16x8xf32>
    %31 = arith.maximumf %29, %30 : vector<16x8xf32>
    %32 = arith.truncf %31 : vector<16x8xf32> to vector<16x8xbf16>
    %c0_24 = arith.constant 0 : index
    %c0_25 = arith.constant 0 : index
    %33 = vector.load %arg8[%c0_24, %c0_25] : memref<8x4xbf16, #tpu.memory_space<vmem>>, vector<8x4xbf16>
    %cst_26 = arith.constant dense<0.000000e+00> : vector<16x4xf32>
    %34 = tpu.matmul %32, %33, %cst_26 {dimension_numbers = #tpu.dot_dimension_numbers<[1], [0], [0], [1], [0, 0, 1, 1], [], []>} : vector<16x8xbf16>, vector<8x4xbf16>, vector<16x4xf32> -> vector<16x4xf32>
    %c0_27 = arith.constant 0 : index
    %c0_28 = arith.constant 0 : index
    %35 = vector.load %arg14[%c0_27, %c0_28] : memref<1x4xf32, #tpu.memory_space<vmem>>, vector<1x4xf32>
    %36 = vector.broadcast %35 : vector<1x4xf32> to vector<16x4xf32>
    %37 = arith.addf %34, %36 : vector<16x4xf32>
    %cst_29 = arith.constant 0.000000e+00 : f32
    %38 = vector.broadcast %cst_29 : f32 to vector<16x4xf32>
    %39 = arith.maximumf %37, %38 : vector<16x4xf32>
    %40 = arith.truncf %39 : vector<16x4xf32> to vector<16x4xbf16>
    %c0_30 = arith.constant 0 : index
    %c0_31 = arith.constant 0 : index
    %41 = vector.load %arg9[%c0_30, %c0_31] : memref<4x2xbf16, #tpu.memory_space<vmem>>, vector<4x2xbf16>
    %cst_32 = arith.constant dense<0.000000e+00> : vector<16x2xf32>
    %42 = tpu.matmul %40, %41, %cst_32 {dimension_numbers = #tpu.dot_dimension_numbers<[1], [0], [0], [1], [0, 0, 1, 1], [], []>} : vector<16x4xbf16>, vector<4x2xbf16>, vector<16x2xf32> -> vector<16x2xf32>
    %c0_33 = arith.constant 0 : index
    %c0_34 = arith.constant 0 : index
    %43 = vector.load %arg15[%c0_33, %c0_34] : memref<1x2xf32, #tpu.memory_space<vmem>>, vector<1x2xf32>
    %44 = vector.broadcast %43 : vector<1x2xf32> to vector<16x2xf32>
    %45 = arith.addf %42, %44 : vector<16x2xf32>
    %c0_35 = arith.constant 0 : index
    %c0_36 = arith.constant 0 : index
    %46 = vector.load %arg2[%c0_35, %c0_36] : memref<16x2xf32, #tpu.memory_space<vmem>>, vector<16x2xf32>
    %47 = arith.addf %45, %46 : vector<16x2xf32>
    %c0_37 = arith.constant 0 : index
    %c0_38 = arith.constant 0 : index
    %48 = vector.load %arg16[%c0_37, %c0_38] : memref<16x2xf32, #tpu.memory_space<vmem>>, vector<16x2xf32>
    tpu.vector_store %arg16[%c0_37, %c0_38], %47 {strides = array<i32>} : memref<16x2xf32, #tpu.memory_space<vmem>>, vector<16x2xf32>,
    %cst_39 = arith.constant 0.000000e+00 : f32
    %49 = vector.broadcast %cst_39 : f32 to vector<16x2xf32>
    %50 = arith.maximumf %46, %49 : vector<16x2xf32>
    %c0_40 = arith.constant 0 : index
    %c0_41 = arith.constant 0 : index
    %51 = vector.load %arg3[%c0_40, %c0_41] : memref<16x2xf32, #tpu.memory_space<vmem>>, vector<16x2xf32>
    %52 = arith.addf %50, %51 : vector<16x2xf32>
    %c0_42 = arith.constant 0 : index
    %c0_43 = arith.constant 0 : index
    %53 = vector.load %arg17[%c0_42, %c0_43] : memref<16x2xf32, #tpu.memory_space<vmem>>, vector<16x2xf32>
    tpu.vector_store %arg17[%c0_42, %c0_43], %52 {strides = array<i32>} : memref<16x2xf32, #tpu.memory_space<vmem>>, vector<16x2xf32>,
    return
  }
  func.func @transform_0(%arg0: i32) -> (i32, i32) {
    %c0_i32 = arith.constant 0 : i32
    %c0_i32_0 = arith.constant 0 : i32
    return %arg0, %c0_i32 : i32, i32
  }
  func.func @transform_1(%arg0: i32) -> (i32, i32) {
    %c0_i32 = arith.constant 0 : i32
    %c0_i32_0 = arith.constant 0 : i32
    return %arg0, %c0_i32 : i32, i32
  }
  func.func @transform_2(%arg0: i32) -> (i32, i32) {
    %c0_i32 = arith.constant 0 : i32
    %c0_i32_0 = arith.constant 0 : i32
    return %arg0, %c0_i32 : i32, i32
  }
  func.func @transform_3(%arg0: i32) -> (i32, i32) {
    %c0_i32 = arith.constant 0 : i32
    %c0_i32_0 = arith.constant 0 : i32
    %c0_i32_1 = arith.constant 0 : i32
    return %c0_i32, %c0_i32_0 : i32, i32
  }
  func.func @transform_4(%arg0: i32) -> (i32, i32) {
    %c0_i32 = arith.constant 0 : i32
    %c0_i32_0 = arith.constant 0 : i32
    %c0_i32_1 = arith.constant 0 : i32
    return %c0_i32, %c0_i32_0 : i32, i32
  }
  func.func @transform_5(%arg0: i32) -> (i32, i32) {
    %c0_i32 = arith.constant 0 : i32
    %c0_i32_0 = arith.constant 0 : i32
    %c0_i32_1 = arith.constant 0 : i32
    return %c0_i32, %c0_i32_0 : i32, i32
  }
  func.func @transform_6(%arg0: i32) -> (i32, i32) {
    %c0_i32 = arith.constant 0 : i32
    %c0_i32_0 = arith.constant 0 : i32
    %c0_i32_1 = arith.constant 0 : i32
    return %c0_i32, %c0_i32_0 : i32, i32
  }
  func.func @transform_7(%arg0: i32) -> (i32, i32) {
    %c0_i32 = arith.constant 0 : i32
    %c0_i32_0 = arith.constant 0 : i32
    %c0_i32_1 = arith.constant 0 : i32
    return %c0_i32, %c0_i32_0 : i32, i32
  }
  func.func @transform_8(%arg0: i32) -> (i32, i32) {
    %c0_i32 = arith.constant 0 : i32
    %c0_i32_0 = arith.constant 0 : i32
    %c0_i32_1 = arith.constant 0 : i32
    return %c0_i32, %c0_i32_0 : i32, i32
  }
  func.func @transform_9(%arg0: i32) -> (i32, i32) {
    %c0_i32 = arith.constant 0 : i32
    %c0_i32_0 = arith.constant 0 : i32
    %c0_i32_1 = arith.constant 0 : i32
    return %c0_i32, %c0_i32_0 : i32, i32
  }
  func.func @transform_10(%arg0: i32) -> (i32, i32) {
    %c0_i32 = arith.constant 0 : i32
    %c0_i32_0 = arith.constant 0 : i32
    %c0_i32_1 = arith.constant 0 : i32
    return %c0_i32, %c0_i32_0 : i32, i32
  }
  func.func @transform_11(%arg0: i32) -> (i32, i32) {
    %c0_i32 = arith.constant 0 : i32
    %c0_i32_0 = arith.constant 0 : i32
    %c0_i32_1 = arith.constant 0 : i32
    return %c0_i32, %c0_i32_0 : i32, i32
  }
  func.func @transform_12(%arg0: i32) -> (i32, i32) {
    %c0_i32 = arith.constant 0 : i32
    %c0_i32_0 = arith.constant 0 : i32
    %c0_i32_1 = arith.constant 0 : i32
    return %c0_i32, %c0_i32_0 : i32, i32
  }
  func.func @transform_13(%arg0: i32) -> (i32, i32) {
    %c0_i32 = arith.constant 0 : i32
    %c0_i32_0 = arith.constant 0 : i32
    %c0_i32_1 = arith.constant 0 : i32
    return %c0_i32, %c0_i32_0 : i32, i32
  }
  func.func @transform_14(%arg0: i32) -> (i32, i32) {
    %c0_i32 = arith.constant 0 : i32
    %c0_i32_0 = arith.constant 0 : i32
    %c0_i32_1 = arith.constant 0 : i32
    return %c0_i32, %c0_i32_0 : i32, i32
  }
  func.func @transform_15(%arg0: i32) -> (i32, i32) {
    %c0_i32 = arith.constant 0 : i32
    %c0_i32_0 = arith.constant 0 : i32
    return %arg0, %c0_i32 : i32, i32
  }
  func.func @transform_16(%arg0: i32) -> (i32, i32) {
    %c0_i32 = arith.constant 0 : i32
    %c0_i32_0 = arith.constant 0 : i32
    return %arg0, %c0_i32 : i32, i32
  }
}

</mosaic_0001>

<llo_original>
// kernel: input_not_used_forward.1
$region0: #{input_not_used_forward.1}
  #allocation0 [shape = 'u32[]', space=smem, size = 0x4, offset = 0x4, fixed_abs, tag = 'smem constant byte address 0x4 - core index']
  #allocation1 [shape = 'u32[144,128]{1,0:T(1,128)}', space=vmem, size = 0x12000, scoped, tag = 'internal scratch']
  %s0 = inlined_call_operand.vmem [shape: bf16[16,128], index: 0, kind: input, shape index: {}]
  %s1 = inlined_call_operand.vmem [shape: f32[16,2], index: 1, kind: input, shape index: {}]
  %s2 = inlined_call_operand.vmem [shape: f32[16,2], index: 2, kind: input, shape index: {}]
  %s3 = inlined_call_operand.vmem [shape: bf16[128,64], index: 3, kind: input, shape index: {}]
  %s4 = inlined_call_operand.vmem [shape: bf16[64,32], index: 4, kind: input, shape index: {}]
  %s5 = inlined_call_operand.vmem [shape: bf16[32,16], index: 5, kind: input, shape index: {}]
  %s6 = inlined_call_operand.vmem [shape: bf16[16,8], index: 6, kind: input, shape index: {}]
  %s7 = inlined_call_operand.vmem [shape: bf16[8,4], index: 7, kind: input, shape index: {}]
  %s8 = inlined_call_operand.vmem [shape: bf16[4,2], index: 8, kind: input, shape index: {}]
  %s9 = inlined_call_operand.vmem [shape: f32[1,64], index: 9, kind: input, shape index: {}]
  %s10 = inlined_call_operand.vmem [shape: f32[1,32], index: 10, kind: input, shape index: {}]
  %s11 = inlined_call_operand.vmem [shape: f32[1,16], index: 11, kind: input, shape index: {}]
  %s12 = inlined_call_operand.vmem [shape: f32[1,8], index: 12, kind: input, shape index: {}]
  %s13 = inlined_call_operand.vmem [shape: f32[1,4], index: 13, kind: input, shape index: {}]
  %s14 = inlined_call_operand.vmem [shape: f32[1,2], index: 14, kind: input, shape index: {}]
  %s15 = inlined_call_operand.vmem [shape: f32[16,2], index: 15, kind: output, shape index: {0}]
  %s16 = inlined_call_operand.vmem [shape: f32[16,2], index: 16, kind: output, shape index: {1}]
  %17 = xla_tuple %s15, %s16
  %s18 = sld [smem:[#allocation0]]
  $region78: #{input_not_used_forward.1} parent=0
    _
  %s20 = ssub.s32 1, %s18
  %s21 = scalar_select 0, %s20, %s18
  // Predicated region
  $region2: #{input_not_used_forward.1} parent=0 // pred_check
    _
  $region3: #{input_not_used_forward.1} parent=0 // pred_check_branch
    %23 = sbr.rel (0) target = $region5
  $region4: #{input_not_used_forward.1} parent=0 // pred_region
    _
  $region5: #{input_not_used_forward.1} parent=0 // pred_fallthru
    _
  // Predicated region
  $region6: #{input_not_used_forward.1} parent=0 // pred_check
    _
  $region7: #{input_not_used_forward.1} parent=0 // pred_check_branch
    %25 = sbr.rel (0) target = $region9
  $region8: #{input_not_used_forward.1} parent=0 // pred_region
    _
  $region9: #{input_not_used_forward.1} parent=0 // pred_fallthru
    _
  // Predicated region
  $region10: #{input_not_used_forward.1} parent=0 // pred_check
    _
  $region11: #{input_not_used_forward.1} parent=0 // pred_check_branch
    %27 = sbr.rel (0) target = $region13
  $region12: #{input_not_used_forward.1} parent=0 // pred_region
    _
  $region13: #{input_not_used_forward.1} parent=0 // pred_fallthru
    _
  // Predicated region
  $region14: #{input_not_used_forward.1} parent=0 // pred_check
    _
  $region15: #{input_not_used_forward.1} parent=0 // pred_check_branch
    %29 = sbr.rel (0) target = $region17
  $region16: #{input_not_used_forward.1} parent=0 // pred_region
    _
  $region17: #{input_not_used_forward.1} parent=0 // pred_fallthru
    _
  // Predicated region
  $region18: #{input_not_used_forward.1} parent=0 // pred_check
    _
  $region19: #{input_not_used_forward.1} parent=0 // pred_check_branch
    %31 = sbr.rel (0) target = $region21
  $region20: #{input_not_used_forward.1} parent=0 // pred_region
    _
  $region21: #{input_not_used_forward.1} parent=0 // pred_fallthru
    _
  // Predicated region
  $region22: #{input_not_used_forward.1} parent=0 // pred_check
    _
  $region23: #{input_not_used_forward.1} parent=0 // pred_check_branch
    %33 = sbr.rel (0) target = $region25
  $region24: #{input_not_used_forward.1} parent=0 // pred_region
    _
  $region25: #{input_not_used_forward.1} parent=0 // pred_fallthru
    _
  // Predicated region
  $region26: #{input_not_used_forward.1} parent=0 // pred_check
    _
  $region27: #{input_not_used_forward.1} parent=0 // pred_check_branch
    %35 = sbr.rel (0) target = $region29
  $region28: #{input_not_used_forward.1} parent=0 // pred_region
    _
  $region29: #{input_not_used_forward.1} parent=0 // pred_fallthru
    _
  // Predicated region
  $region30: #{input_not_used_forward.1} parent=0 // pred_check
    _
  $region31: #{input_not_used_forward.1} parent=0 // pred_check_branch
    %37 = sbr.rel (0) target = $region33
  $region32: #{input_not_used_forward.1} parent=0 // pred_region
    _
  $region33: #{input_not_used_forward.1} parent=0 // pred_fallthru
    _
  // Predicated region
  $region34: #{input_not_used_forward.1} parent=0 // pred_check
    _
  $region35: #{input_not_used_forward.1} parent=0 // pred_check_branch
    %39 = sbr.rel (0) target = $region37
  $region36: #{input_not_used_forward.1} parent=0 // pred_region
    _
  $region37: #{input_not_used_forward.1} parent=0 // pred_fallthru
    _
  // Predicated region
  $region38: #{input_not_used_forward.1} parent=0 // pred_check
    _
  $region39: #{input_not_used_forward.1} parent=0 // pred_check_branch
    %41 = sbr.rel (0) target = $region41
  $region40: #{input_not_used_forward.1} parent=0 // pred_region
    _
  $region41: #{input_not_used_forward.1} parent=0 // pred_fallthru
    _
  // Predicated region
  $region42: #{input_not_used_forward.1} parent=0 // pred_check
    _
  $region43: #{input_not_used_forward.1} parent=0 // pred_check_branch
    %43 = sbr.rel (0) target = $region45
  $region44: #{input_not_used_forward.1} parent=0 // pred_region
    _
  $region45: #{input_not_used_forward.1} parent=0 // pred_fallthru
    _
  // Predicated region
  $region46: #{input_not_used_forward.1} parent=0 // pred_check
    _
  $region47: #{input_not_used_forward.1} parent=0 // pred_check_branch
    %45 = sbr.rel (0) target = $region49
  $region48: #{input_not_used_forward.1} parent=0 // pred_region
    _
  $region49: #{input_not_used_forward.1} parent=0 // pred_fallthru
    _
  // Predicated region
  $region50: #{input_not_used_forward.1} parent=0 // pred_check
    _
  $region51: #{input_not_used_forward.1} parent=0 // pred_check_branch
    %47 = sbr.rel (0) target = $region53
  $region52: #{input_not_used_forward.1} parent=0 // pred_region
    _
  $region53: #{input_not_used_forward.1} parent=0 // pred_fallthru
    _
  // Predicated region
  $region54: #{input_not_used_forward.1} parent=0 // pred_check
    _
  $region55: #{input_not_used_forward.1} parent=0 // pred_check_branch
    %49 = sbr.rel (0) target = $region57
  $region56: #{input_not_used_forward.1} parent=0 // pred_region
    _
  $region57: #{input_not_used_forward.1} parent=0 // pred_fallthru
    _
  // Predicated region
  $region58: #{input_not_used_forward.1} parent=0 // pred_check
    _
  $region59: #{input_not_used_forward.1} parent=0 // pred_check_branch
    %51 = sbr.rel (0) target = $region61
  $region60: #{input_not_used_forward.1} parent=0 // pred_region
    _
  $region61: #{input_not_used_forward.1} parent=0 // pred_fallthru
    _
  %v53 = vld [vmem:[%s0] sm:$0xf]
  %v54 = vld [vmem:[%s0 + $0x4] sm:$0xf]
  %v55 = vld [vmem:[%s3] sm:$0xf]
  %v56 = vld [vmem:[%s3 + $0x4] sm:$0xf]
  %v57 = vld [vmem:[%s3 + $0x8] sm:$0xf]
  %v58 = vld [vmem:[%s3 + $0xc] sm:$0xf]
  %v59 = vld [vmem:[%s3 + $0x10] sm:$0xf]
  %v60 = vld [vmem:[%s3 + $0x14] sm:$0xf]
  %v61 = vld [vmem:[%s3 + $0x18] sm:$0xf]
  %v62 = vld [vmem:[%s3 + $0x1c] sm:$0xf]
  %v63 = vld [vmem:[%s3 + $0x20] sm:$0xf]
  %v64 = vld [vmem:[%s3 + $0x24] sm:$0xf]
  %v65 = vld [vmem:[%s3 + $0x28] sm:$0xf]
  %v66 = vld [vmem:[%s3 + $0x2c] sm:$0xf]
  %v67 = vld [vmem:[%s3 + $0x30] sm:$0xf]
  %v68 = vld [vmem:[%s3 + $0x34] sm:$0xf]
  %v69 = vld [vmem:[%s3 + $0x38] sm:$0xf]
  %v70 = vld [vmem:[%s3 + $0x3c] sm:$0xf]
  %v71 = vld [vmem:[%s9] sm:$0x1]
  %v73 = vlaneseq
  %v74 = vshrl.u32 %v73, 7
  %v75 = vsub.s32 0, %v74
  %v76 = vrot.slane %v71, %v75
  %v80 = vunpack.c.l.b16 %v53
  %v81 = vunpack.c.l.b16 %v54
  %v82 = vpack.c.b16 %v81, %v80
  %v100 = vunpack.c.l.b16 %v55
  %v101 = vunpack.c.l.b16 %v56
  %v102 = vunpack.c.l.b16 %v57
  %v103 = vunpack.c.l.b16 %v58
  %v104 = vunpack.c.l.b16 %v59
  %v105 = vunpack.c.l.b16 %v60
  %v106 = vunpack.c.l.b16 %v61
  %v107 = vunpack.c.l.b16 %v62
  %v108 = vunpack.c.l.b16 %v63
  %v109 = vunpack.c.l.b16 %v64
  %v110 = vunpack.c.l.b16 %v65
  %v111 = vunpack.c.l.b16 %v66
  %v112 = vunpack.c.l.b16 %v67
  %v113 = vunpack.c.l.b16 %v68
  %v114 = vunpack.c.l.b16 %v69
  %v115 = vunpack.c.l.b16 %v70
  %v116 = vpack.c.b16 %v101, %v100
  %v117 = vpack.c.b16 %v103, %v102
  %v118 = vpack.c.b16 %v105, %v104
  %v119 = vpack.c.b16 %v107, %v106
  %v120 = vpack.c.b16 %v109, %v108
  %v121 = vpack.c.b16 %v111, %v110
  %v122 = vpack.c.b16 %v113, %v112
  %v123 = vpack.c.b16 %v115, %v114
  %132 = vmatprep.subr.bf16.mxu0 0
  %133 = vmatpush1.bf16.msra.mxu0 %v116
  %134 = vmatprep.subr.bf16.mxu0 0
  %135 = vmatpush1.bf16.msra.mxu0 %v117
  %136 = vmatprep.subr.bf16.mxu0 0
  %137 = vmatpush1.bf16.msra.mxu0 %v118
  %138 = vmatprep.subr.bf16.mxu0 0
  %139 = vmatpush1.bf16.msra.mxu0 %v119
  %140 = vmatprep.subr.bf16.mxu0 0
  %141 = vmatpush1.bf16.msra.mxu0 %v120
  %142 = vmatprep.subr.bf16.mxu0 0
  %143 = vmatpush1.bf16.msra.mxu0 %v121
  %144 = vmatprep.subr.bf16.mxu0 0
  %145 = vmatpush1.bf16.msra.mxu0 %v122
  %146 = vmatprep.subr.bf16.mxu0 0
  %147 = vmatpush1.bf16.msra.mxu0 %v123
  %148 = vmatprep.subr.bf16.mxu0 0
  %149 = vmatpush1.bf16.msra.mxu0 0
  %150 = vmatprep.subr.bf16.mxu0 0
  %151 = vmatpush1.bf16.msra.mxu0 0
  %152 = vmatprep.subr.bf16.mxu0 0
  %153 = vmatpush1.bf16.msra.mxu0 0
  %154 = vmatprep.subr.bf16.mxu0 0
  %155 = vmatpush1.bf16.msra.mxu0 0
  %156 = vmatprep.subr.bf16.mxu0 0
  %157 = vmatpush1.bf16.msra.mxu0 0
  %158 = vmatprep.subr.bf16.mxu0 0
  %159 = vmatpush1.bf16.msra.mxu0 0
  %160 = vmatprep.subr.bf16.mxu0 0
  %161 = vmatpush1.bf16.msra.mxu0 0
  %162 = vmatprep.subr.bf16.mxu0 0
  %163 = vmatpush1.bf16.msra.mxu0 0
  %164 = vmatprep.mubr.bf16.mxu0 0
  %165 = vmatmul.mubr.bf16.gmra.mrb[0].mxu0 %v82
  %v166 = vpop.f32.mrb[0].mxu0
  %v167 = vadd.f32 %v76, %v166
  %v168 = vpop.f32.mrb[0].mxu0
  %v169 = vpop.f32.mrb[0].mxu0
  %v170 = vadd.f32 %v76, %v169
  %v171 = vpop.f32.mrb[0].mxu0
  %172 = vdwg.mxu0
  %v173 = vmax.f32 %v167, 0.0
  %v174 = vmax.f32 %v170, 0.0
  %v175 = vpack.c.bf16 %v174, %v173
  %v176 = vld [vmem:[%s4] sm:$0xf]
  %v177 = vld [vmem:[%s4 + $0x4] sm:$0xf]
  %v178 = vld [vmem:[%s4 + $0x8] sm:$0xf]
  %v179 = vld [vmem:[%s4 + $0xc] sm:$0xf]
  %v180 = vld [vmem:[%s4 + $0x10] sm:$0xf]
  %v181 = vld [vmem:[%s4 + $0x14] sm:$0xf]
  %v182 = vld [vmem:[%s4 + $0x18] sm:$0xf]
  %v183 = vld [vmem:[%s4 + $0x1c] sm:$0xf]
  %v184 = vld [vmem:[%s10] sm:$0x1]
  %v186 = vlaneseq
  %v187 = vshrl.u32 %v186, 7
  %v188 = vsub.s32 0, %v187
  %v189 = vrot.slane %v184, %v188
  %v199 = vunpack.c.l.b16 %v176
  %v200 = vunpack.c.l.b16 %v177
  %v201 = vunpack.c.l.b16 %v178
  %v202 = vunpack.c.l.b16 %v179
  %v203 = vunpack.c.l.b16 %v180
  %v204 = vunpack.c.l.b16 %v181
  %v205 = vunpack.c.l.b16 %v182
  %v206 = vunpack.c.l.b16 %v183
  %v207 = vpack.c.b16 %v200, %v199
  %v208 = vpack.c.b16 %v202, %v201
  %v209 = vpack.c.b16 %v204, %v203
  %v210 = vpack.c.b16 %v206, %v205
  %vm215 = vcmask 523264
  %v217 = vsel %vm215, %v175, 0
  %219 = vmatprep.subr.bf16.mxu0 0
  %220 = vmatpush1.bf16.msra.mxu0 %v207
  %221 = vmatprep.subr.bf16.mxu0 0
  %222 = vmatpush1.bf16.msra.mxu0 %v208
  %223 = vmatprep.subr.bf16.mxu0 0
  %224 = vmatpush1.bf16.msra.mxu0 %v209
  %225 = vmatprep.subr.bf16.mxu0 0
  %226 = vmatpush1.bf16.msra.mxu0 %v210
  %227 = vmatprep.subr.bf16.mxu0 0
  %228 = vmatpush1.bf16.msra.mxu0 0
  %229 = vmatprep.subr.bf16.mxu0 0
  %230 = vmatpush1.bf16.msra.mxu0 0
  %231 = vmatprep.subr.bf16.mxu0 0
  %232 = vmatpush1.bf16.msra.mxu0 0
  %233 = vmatprep.subr.bf16.mxu0 0
  %234 = vmatpush1.bf16.msra.mxu0 0
  %235 = vmatprep.subr.bf16.mxu0 0
  %236 = vmatpush1.bf16.msra.mxu0 0
  %237 = vmatprep.subr.bf16.mxu0 0
  %238 = vmatpush1.bf16.msra.mxu0 0
  %239 = vmatprep.subr.bf16.mxu0 0
  %240 = vmatpush1.bf16.msra.mxu0 0
  %241 = vmatprep.subr.bf16.mxu0 0
  %242 = vmatpush1.bf16.msra.mxu0 0
  %243 = vmatprep.subr.bf16.mxu0 0
  %244 = vmatpush1.bf16.msra.mxu0 0
  %245 = vmatprep.subr.bf16.mxu0 0
  %246 = vmatpush1.bf16.msra.mxu0 0
  %247 = vmatprep.subr.bf16.mxu0 0
  %248 = vmatpush1.bf16.msra.mxu0 0
  %249 = vmatprep.subr.bf16.mxu0 0
  %250 = vmatpush1.bf16.msra.mxu0 0
  %251 = vmatprep.mubr.bf16.mxu0 0
  %252 = vmatmul.mubr.bf16.gmra.mrb[0].mxu0 %v217
  %v253 = vpop.f32.mrb[0].mxu0
  %v254 = vadd.f32 %v189, %v253
  %v255 = vpop.f32.mrb[0].mxu0
  %v256 = vpop.f32.mrb[0].mxu0
  %v257 = vadd.f32 %v189, %v256
  %v258 = vpop.f32.mrb[0].mxu0
  %259 = vdwg.mxu0
  %v260 = vmax.f32 %v254, 0.0
  %v261 = vmax.f32 %v257, 0.0
  %v262 = vpack.c.bf16 %v261, %v260
  %v263 = vld [vmem:[%s5] sm:$0xf]
  %v264 = vld [vmem:[%s5 + $0x4] sm:$0xf]
  %v265 = vld [vmem:[%s5 + $0x8] sm:$0xf]
  %v266 = vld [vmem:[%s5 + $0xc] sm:$0xf]
  %v267 = vld [vmem:[%s11] sm:$0x1]
  %v269 = vlaneseq
  %v270 = vshrl.u32 %v269, 7
  %v271 = vsub.s32 0, %v270
  %v272 = vrot.slane %v267, %v271
  %v278 = vunpack.c.l.b16 %v263
  %v279 = vunpack.c.l.b16 %v264
  %v280 = vunpack.c.l.b16 %v265
  %v281 = vunpack.c.l.b16 %v266
  %v282 = vpack.c.b16 %v279, %v278
  %v283 = vpack.c.b16 %v281, %v280
  %vm286 = vcmask 261120
  %v288 = vsel %vm286, %v262, 0
  %290 = vmatprep.subr.bf16.mxu0 0
  %291 = vmatpush1.bf16.msra.mxu0 %v282
  %292 = vmatprep.subr.bf16.mxu0 0
  %293 = vmatpush1.bf16.msra.mxu0 %v283
  %294 = vmatprep.subr.bf16.mxu0 0
  %295 = vmatpush1.bf16.msra.mxu0 0
  %296 = vmatprep.subr.bf16.mxu0 0
  %297 = vmatpush1.bf16.msra.mxu0 0
  %298 = vmatprep.subr.bf16.mxu0 0
  %299 = vmatpush1.bf16.msra.mxu0 0
  %300 = vmatprep.subr.bf16.mxu0 0
  %301 = vmatpush1.bf16.msra.mxu0 0
  %302 = vmatprep.subr.bf16.mxu0 0
  %303 = vmatpush1.bf16.msra.mxu0 0
  %304 = vmatprep.subr.bf16.mxu0 0
  %305 = vmatpush1.bf16.msra.mxu0 0
  %306 = vmatprep.subr.bf16.mxu0 0
  %307 = vmatpush1.bf16.msra.mxu0 0
  %308 = vmatprep.subr.bf16.mxu0 0
  %309 = vmatpush1.bf16.msra.mxu0 0
  %310 = vmatprep.subr.bf16.mxu0 0
  %311 = vmatpush1.bf16.msra.mxu0 0
  %312 = vmatprep.subr.bf16.mxu0 0
  %313 = vmatpush1.bf16.msra.mxu0 0
  %314 = vmatprep.subr.bf16.mxu0 0
  %315 = vmatpush1.bf16.msra.mxu0 0
  %316 = vmatprep.subr.bf16.mxu0 0
  %317 = vmatpush1.bf16.msra.mxu0 0
  %318 = vmatprep.subr.bf16.mxu0 0
  %319 = vmatpush1.bf16.msra.mxu0 0
  %320 = vmatprep.subr.bf16.mxu0 0
  %321 = vmatpush1.bf16.msra.mxu0 0
  %322 = vmatprep.mubr.bf16.mxu0 0
  %323 = vmatmul.mubr.bf16.gmra.mrb[0].mxu0 %v288
  %v324 = vpop.f32.mrb[0].mxu0
  %v325 = vadd.f32 %v272, %v324
  %v326 = vpop.f32.mrb[0].mxu0
  %v327 = vpop.f32.mrb[0].mxu0
  %v328 = vadd.f32 %v272, %v327
  %v329 = vpop.f32.mrb[0].mxu0
  %330 = vdwg.mxu0
  %v331 = vmax.f32 %v325, 0.0
  %v332 = vmax.f32 %v328, 0.0
  %v333 = vpack.c.bf16 %v332, %v331
  %v334 = vld [vmem:[%s6] sm:$0xf]
  %v335 = vld [vmem:[%s6 + $0x4] sm:$0xf]
  %v336 = vld [vmem:[%s12] sm:$0x1]
  %v338 = vlaneseq
  %v339 = vshrl.u32 %v338, 7
  %v340 = vsub.s32 0, %v339
  %v341 = vrot.slane %v336, %v340
  %v345 = vunpack.c.l.b16 %v334
  %v346 = vunpack.c.l.b16 %v335
  %v347 = vpack.c.b16 %v346, %v345
  %vm349 = vcmask 130048
  %v351 = vsel %vm349, %v333, 0
  %353 = vmatprep.subr.bf16.mxu0 0
  %354 = vmatpush1.bf16.msra.mxu0 %v347
  %355 = vmatprep.subr.bf16.mxu0 0
  %356 = vmatpush1.bf16.msra.mxu0 0
  %357 = vmatprep.subr.bf16.mxu0 0
  %358 = vmatpush1.bf16.msra.mxu0 0
  %359 = vmatprep.subr.bf16.mxu0 0
  %360 = vmatpush1.bf16.msra.mxu0 0
  %361 = vmatprep.subr.bf16.mxu0 0
  %362 = vmatpush1.bf16.msra.mxu0 0
  %363 = vmatprep.subr.bf16.mxu0 0
  %364 = vmatpush1.bf16.msra.mxu0 0
  %365 = vmatprep.subr.bf16.mxu0 0
  %366 = vmatpush1.bf16.msra.mxu0 0
  %367 = vmatprep.subr.bf16.mxu0 0
  %368 = vmatpush1.bf16.msra.mxu0 0
  %369 = vmatprep.subr.bf16.mxu0 0
  %370 = vmatpush1.bf16.msra.mxu0 0
  %371 = vmatprep.subr.bf16.mxu0 0
  %372 = vmatpush1.bf16.msra.mxu0 0
  %373 = vmatprep.subr.bf16.mxu0 0
  %374 = vmatpush1.bf16.msra.mxu0 0
  %375 = vmatprep.subr.bf16.mxu0 0
  %376 = vmatpush1.bf16.msra.mxu0 0
  %377 = vmatprep.subr.bf16.mxu0 0
  %378 = vmatpush1.bf16.msra.mxu0 0
  %379 = vmatprep.subr.bf16.mxu0 0
  %380 = vmatpush1.bf16.msra.mxu0 0
  %381 = vmatprep.subr.bf16.mxu0 0
  %382 = vmatpush1.bf16.msra.mxu0 0
  %383 = vmatprep.subr.bf16.mxu0 0
  %384 = vmatpush1.bf16.msra.mxu0 0
  %385 = vmatprep.mubr.bf16.mxu0 0
  %386 = vmatmul.mubr.bf16.gmra.mrb[0].mxu0 %v351
  %v387 = vpop.f32.mrb[0].mxu0
  %v388 = vadd.f32 %v341, %v387
  %v389 = vpop.f32.mrb[0].mxu0
  %v390 = vpop.f32.mrb[0].mxu0
  %v391 = vadd.f32 %v341, %v390
  %v392 = vpop.f32.mrb[0].mxu0
  %393 = vdwg.mxu0
  %v394 = vmax.f32 %v388, 0.0
  %v395 = vmax.f32 %v391, 0.0
  %v396 = vpack.c.bf16 %v395, %v394
  %v397 = vld [vmem:[%s7] sm:$0xf]
  %v398 = vld [vmem:[%s13] sm:$0x1]
  %v400 = vlaneseq
  %v401 = vshrl.u32 %v400, 7
  %v402 = vsub.s32 0, %v401
  %v403 = vrot.slane %v398, %v402
  %vm405 = vcmask 64512
  %v407 = vsel %vm405, %v396, 0
  %vm409 = vcmask 1043456
  %v411 = vsel %vm409, %v397, 0
  %413 = vmatprep.subr.bf16.mxu0 0
  %414 = vmatpush1.bf16.msra.mxu0 %v411
  %415 = vmatprep.subr.bf16.mxu0 0
  %416 = vmatpush1.bf16.msra.mxu0 0
  %417 = vmatprep.subr.bf16.mxu0 0
  %418 = vmatpush1.bf16.msra.mxu0 0
  %419 = vmatprep.subr.bf16.mxu0 0
  %420 = vmatpush1.bf16.msra.mxu0 0
  %421 = vmatprep.subr.bf16.mxu0 0
  %422 = vmatpush1.bf16.msra.mxu0 0
  %423 = vmatprep.subr.bf16.mxu0 0
  %424 = vmatpush1.bf16.msra.mxu0 0
  %425 = vmatprep.subr.bf16.mxu0 0
  %426 = vmatpush1.bf16.msra.mxu0 0
  %427 = vmatprep.subr.bf16.mxu0 0
  %428 = vmatpush1.bf16.msra.mxu0 0
  %429 = vmatprep.subr.bf16.mxu0 0
  %430 = vmatpush1.bf16.msra.mxu0 0
  %431 = vmatprep.subr.bf16.mxu0 0
  %432 = vmatpush1.bf16.msra.mxu0 0
  %433 = vmatprep.subr.bf16.mxu0 0
  %434 = vmatpush1.bf16.msra.mxu0 0
  %435 = vmatprep.subr.bf16.mxu0 0
  %436 = vmatpush1.bf16.msra.mxu0 0
  %437 = vmatprep.subr.bf16.mxu0 0
  %438 = vmatpush1.bf16.msra.mxu0 0
  %439 = vmatprep.subr.bf16.mxu0 0
  %440 = vmatpush1.bf16.msra.mxu0 0
  %441 = vmatprep.subr.bf16.mxu0 0
  %442 = vmatpush1.bf16.msra.mxu0 0
  %443 = vmatprep.subr.bf16.mxu0 0
  %444 = vmatpush1.bf16.msra.mxu0 0
  %445 = vmatprep.mubr.bf16.mxu0 0
  %446 = vmatmul.mubr.bf16.gmra.mrb[0].mxu0 %v407
  %v447 = vpop.f32.mrb[0].mxu0
  %v448 = vadd.f32 %v403, %v447
  %v449 = vpop.f32.mrb[0].mxu0
  %v450 = vpop.f32.mrb[0].mxu0
  %v451 = vadd.f32 %v403, %v450
  %v452 = vpop.f32.mrb[0].mxu0
  %453 = vdwg.mxu0
  %v454 = vmax.f32 %v448, 0.0
  %v455 = vmax.f32 %v451, 0.0
  %v456 = vpack.c.bf16 %v455, %v454
  %v457 = vld [vmem:[%s8] sm:$0x3]
  %v458 = vld [vmem:[%s14] sm:$0x1]
  %v460 = vlaneseq
  %v461 = vshrl.u32 %v460, 7
  %v462 = vsub.s32 0, %v461
  %v463 = vrot.slane %v458, %v462
  %vm465 = vcmask 31744
  %v467 = vsel %vm465, %v456, 0
  %vm469 = vcmask 1041408
  %v471 = vsel %vm469, %v457, 0
  %473 = vmatprep.subr.bf16.mxu0 0
  %474 = vmatpush1.bf16.msra.mxu0 %v471
  %475 = vmatprep.subr.bf16.mxu0 0
  %476 = vmatpush1.bf16.msra.mxu0 0
  %477 = vmatprep.subr.bf16.mxu0 0
  %478 = vmatpush1.bf16.msra.mxu0 0
  %479 = vmatprep.subr.bf16.mxu0 0
  %480 = vmatpush1.bf16.msra.mxu0 0
  %481 = vmatprep.subr.bf16.mxu0 0
  %482 = vmatpush1.bf16.msra.mxu0 0
  %483 = vmatprep.subr.bf16.mxu0 0
  %484 = vmatpush1.bf16.msra.mxu0 0
  %485 = vmatprep.subr.bf16.mxu0 0
  %486 = vmatpush1.bf16.msra.mxu0 0
  %487 = vmatprep.subr.bf16.mxu0 0
  %488 = vmatpush1.bf16.msra.mxu0 0
  %489 = vmatprep.subr.bf16.mxu0 0
  %490 = vmatpush1.bf16.msra.mxu0 0
  %491 = vmatprep.subr.bf16.mxu0 0
  %492 = vmatpush1.bf16.msra.mxu0 0
  %493 = vmatprep.subr.bf16.mxu0 0
  %494 = vmatpush1.bf16.msra.mxu0 0
  %495 = vmatprep.subr.bf16.mxu0 0
  %496 = vmatpush1.bf16.msra.mxu0 0
  %497 = vmatprep.subr.bf16.mxu0 0
  %498 = vmatpush1.bf16.msra.mxu0 0
  %499 = vmatprep.subr.bf16.mxu0 0
  %500 = vmatpush1.bf16.msra.mxu0 0
  %501 = vmatprep.subr.bf16.mxu0 0
  %502 = vmatpush1.bf16.msra.mxu0 0
  %503 = vmatprep.subr.bf16.mxu0 0
  %504 = vmatpush1.bf16.msra.mxu0 0
  %505 = vmatprep.mubr.bf16.mxu0 0
  %506 = vmatmul.mubr.bf16.gmra.mrb[0].mxu0 %v467
  %v507 = vpop.f32.mrb[0].mxu0
  %v508 = vadd.f32 %v463, %v507
  %v509 = vpop.f32.mrb[0].mxu0
  %v510 = vpop.f32.mrb[0].mxu0
  %v511 = vadd.f32 %v463, %v510
  %v512 = vpop.f32.mrb[0].mxu0
  %513 = vdwg.mxu0
  %v514 = vld [vmem:[%s1] sm:$0xff]
  %v515 = vld [vmem:[%s1 + $0x8] sm:$0xff]
  %v516 = vadd.f32 %v508, %v514
  %v517 = vadd.f32 %v511, %v515
  %vm518 = vcmask 15360
  %519 = vst.msk [vmem:[%s15] sm:$0xff] %vm518, %v516
  %520 = vst.msk [vmem:[%s15 + $0x8] sm:$0xff] %vm518, %v517
  %v521 = vmax.f32 %v514, 0.0
  %v522 = vmax.f32 %v515, 0.0
  %v523 = vld [vmem:[%s2] sm:$0xff]
  %v524 = vld [vmem:[%s2 + $0x8] sm:$0xff]
  %v525 = vadd.f32 %v521, %v523
  %v526 = vadd.f32 %v522, %v524
  %527 = vst.msk [vmem:[%s16] sm:$0xff] %vm518, %v525
  %528 = vst.msk [vmem:[%s16 + $0x8] sm:$0xff] %vm518, %v526
  // Predicated region
  $region62: #{input_not_used_forward.1} parent=0 // pred_check
    _
  $region63: #{input_not_used_forward.1} parent=0 // pred_check_branch
    %530 = sbr.rel (0) target = $region65
  $region64: #{input_not_used_forward.1} parent=0 // pred_region
    _
  $region65: #{input_not_used_forward.1} parent=0 // pred_fallthru
    _
  // Predicated region
  $region66: #{input_not_used_forward.1} parent=0 // pred_check
    _
  $region67: #{input_not_used_forward.1} parent=0 // pred_check_branch
    %532 = sbr.rel (0) target = $region69
  $region68: #{input_not_used_forward.1} parent=0 // pred_region
    _
  $region69: #{input_not_used_forward.1} parent=0 // pred_fallthru
    _
  // Predicated region
  $region70: #{input_not_used_forward.1} parent=0 // pred_check
    _
  $region71: #{input_not_used_forward.1} parent=0 // pred_check_branch
    %534 = sbr.rel (0) target = $region73
  $region72: #{input_not_used_forward.1} parent=0 // pred_region
    _
  $region73: #{input_not_used_forward.1} parent=0 // pred_fallthru
    _
  // Predicated region
  $region74: #{input_not_used_forward.1} parent=0 // pred_check
    _
  $region75: #{input_not_used_forward.1} parent=0 // pred_check_branch
    %536 = sbr.rel (0) target = $region77
  $region76: #{input_not_used_forward.1} parent=0 // pred_region
    _
  $region77: #{input_not_used_forward.1} parent=0 // pred_fallthru
    _

</llo_original>
